<compile_context>
chip_gen: v7x
topology: tpu7x:2x2x1
jax: 0.10.0
libtpu: 0.0.40
codegen_flags: <defaults>
</compile_context>

<pallas_src>
import functools

import jax
import jax.numpy as jnp
from jax.experimental import pallas as pl
from jax.experimental.pallas import tpu as pltpu


def _linear_kernel_inplace(x_ref, w_ref, b_ref, o_ref):
    """f32 output: accumulate directly into the resident output tile."""
    k = pl.program_id(2)

    @pl.when(k == 0)
    def _():
        o_ref[...] = jnp.zeros_like(o_ref)

    o_ref[...] += jnp.dot(
        x_ref[...], w_ref[...], preferred_element_type=jnp.float32
    )

    @pl.when(k == pl.num_programs(2) - 1)
    def _():
        o_ref[...] = o_ref[...] + b_ref[...]


def _linear_kernel_acc(x_ref, w_ref, b_ref, o_ref, acc_ref):
    """Non-f32 output: f32 scratch accumulator, cast once at the end."""
    k = pl.program_id(2)

    @pl.when(k == 0)
    def _():
        acc_ref[...] = jnp.zeros_like(acc_ref)

    acc_ref[...] += jnp.dot(
        x_ref[...], w_ref[...], preferred_element_type=jnp.float32
    )

    @pl.when(k == pl.num_programs(2) - 1)
    def _():
        o_ref[...] = (acc_ref[...] + b_ref[...]).astype(o_ref.dtype)


def _round_up(v, m):
    return ((v + m - 1) // m) * m


def _choose_tiles(M, N, K):
    """Large tiles clamped to the problem; keeps MXU fed and grid steps few."""
    tm = min(256, _round_up(M, 8))       # sublane dim: multiple of 8
    tn = min(512, _round_up(N, 128))     # lane dim: multiple of 128
    if K % 128 != 0 and K <= 2048:
        tk = K                           # block == full dim is legal; no K padding
    else:
        tk = min(1024, _round_up(K, 128))
    return tm, tn, tk


@functools.partial(jax.jit, static_argnames=("tm", "tn", "tk"))
def _linear_projection_2d(x, w_t, b, *, tm, tn, tk):
    M, K = x.shape
    _, N = w_t.shape

    Mp, Np, Kp = _round_up(M, tm), _round_up(N, tn), _round_up(K, tk)

    # Zero-pad to tile multiples (zero rows/cols along K contribute nothing).
    if (Mp, Kp) != (M, K):
        x = jnp.pad(x, ((0, Mp - M), (0, Kp - K)))
    if (Kp, Np) != (K, N):
        w_t = jnp.pad(w_t, ((0, Kp - K), (0, Np - N)))
    b2d = (jnp.pad(b, (0, Np - N)) if Np != N else b).reshape(1, Np)

    grid = (Mp // tm, Np // tn, Kp // tk)

    out_dtype = x.dtype
    if out_dtype == jnp.float32:
        kernel = _linear_kernel_inplace
        scratch = []
    else:
        kernel = _linear_kernel_acc
        scratch = [pltpu.VMEM((tm, tn), jnp.float32)]

    itemsize = jnp.dtype(x.dtype).itemsize
    vmem_est = (
        2 * (tm * tk + tk * tn) * itemsize      # double-buffered x / w_t tiles
        + tm * tn * jnp.dtype(out_dtype).itemsize
        + (tm * tn * 4 if scratch else 0)
        + 2 * tn * itemsize                     # bias tile
    )
    # Headroom, but capped to stay within v7x's 64 MiB physical VMEM.
    vmem_limit = int(min(48 * 1024 * 1024, max(32 * 1024 * 1024, 2 * vmem_est)))

    y = pl.pallas_call(
        kernel,
        out_shape=jax.ShapeDtypeStruct((Mp, Np), out_dtype),
        grid_spec=pltpu.PrefetchScalarGridSpec(
            num_scalar_prefetch=0,
            grid=grid,
            in_specs=[
                pl.BlockSpec((tm, tk), lambda i, j, k: (i, k)),   # x tile
                pl.BlockSpec((tk, tn), lambda i, j, k: (k, j)),   # w_t tile
                pl.BlockSpec((1, tn), lambda i, j, k: (0, j)),    # bias (k-invariant)
            ],
            out_specs=pl.BlockSpec((tm, tn), lambda i, j, k: (i, j)),
            scratch_shapes=scratch,
        ),
        compiler_params=pltpu.CompilerParams(
            dimension_semantics=("parallel", "parallel", "arbitrary"),
            vmem_limit_bytes=vmem_limit,
        ),
    )(x, w_t, b2d)

    if (Mp, Np) != (M, N):
        y = y[:M, :N]
    return y


def linear_projection(x, w_t, b, *, tm=None, tn=None, tk=None):
    """y = x @ w_t + b, matching nn.Linear over arbitrary leading dims.

    x: (..., K), w_t: (K, N), b: (N,) -> y: (..., N)
    """
    K, N = w_t.shape
    assert x.shape[-1] == K and b.shape == (N,)
    lead_shape = x.shape[:-1]
    x2d = x.reshape(-1, K)
    M = x2d.shape[0]
    atm, atn, atk = _choose_tiles(M, N, K)
    y2d = _linear_projection_2d(
        x2d, w_t, b, tm=tm or atm, tn=tn or atn, tk=tk or atk
    )
    return y2d.reshape(*lead_shape, N)


class LinearProjectionPallas:
    """Mirrors research/model/attack_model.py::LinearProjection forward."""

    def __init__(self, in_num, out_num, key):
        kw, kb = jax.random.split(key)
        # nn.Linear default init: U(-1/sqrt(in_num), 1/sqrt(in_num)) for W and b.
        bound = 1.0 / (in_num ** 0.5)
        # PyTorch weight shape is (out_num, in_num); store transposed (in_num, out_num).
        self.w_t = jax.random.uniform(
            kw, (in_num, out_num), jnp.float32, minval=-bound, maxval=bound
        )
        self.b = jax.random.uniform(
            kb, (out_num,), jnp.float32, minval=-bound, maxval=bound
        )

    def __call__(self, embs):
        return linear_projection(embs, self.w_t, self.b)


if __name__ == "__main__":
    key = jax.random.PRNGKey(0)
    k_x, k_p, k_x2, k_p2, k_x3 = jax.random.split(key, 5)

    # 1) The module's natural small shape (single grid step, full-dim K block).
    batch, in_num, out_num = 8, 32, 128
    x = jax.random.normal(k_x, (batch, in_num), jnp.float32)
    model = LinearProjectionPallas(in_num, out_num, k_p)
    y = jax.block_until_ready(model(x))
    y_ref = x @ model.w_t + model.b
    assert y.shape == (batch, out_num)
    assert jnp.allclose(y, y_ref, atol=1e-5, rtol=1e-5)

    # 2) Ragged shape exercising the padding / tile-clamping path.
    batch2, in_num2, out_num2 = 16, 96, 160
    x2 = jax.random.normal(k_x2, (batch2, in_num2), jnp.float32)
    model2 = LinearProjectionPallas(in_num2, out_num2, k_p2)
    y2 = jax.block_until_ready(model2(x2))
    y2_ref = x2 @ model2.w_t + model2.b
    assert y2.shape == (batch2, out_num2)
    assert jnp.allclose(y2, y2_ref, atol=1e-5, rtol=1e-5)

    # 3) 3-D embeddings (batch, seq, in) — nn.Linear leading-dim semantics.
    x3 = jax.random.normal(k_x3, (2, 8, in_num), jnp.float32)
    y3 = jax.block_until_ready(model(x3))
    y3_ref = x3 @ model.w_t + model.b
    assert y3.shape == (2, 8, out_num)
    assert jnp.allclose(y3, y3_ref, atol=1e-5, rtol=1e-5)

    print("KERNEL_OK")
</pallas_src>

<mosaic_0001>
module attributes {stable_mosaic.version = 11 : i64} {
  func.func @_linear_kernel_inplace(%arg0: i32, %arg1: i32, %arg2: i32, %arg3: memref<8x32xf32, #tpu.memory_space<vmem>>, %arg4: memref<32x128xf32, #tpu.memory_space<vmem>>, %arg5: memref<1x128xf32, #tpu.memory_space<vmem>>, %arg6: memref<8x128xf32, #tpu.memory_space<vmem>>) attributes {dimension_semantics = [#tpu.dimension_semantics<parallel>, #tpu.dimension_semantics<parallel>, #tpu.dimension_semantics<arbitrary>], iteration_bounds = array<i64: 1, 1, 1>, scalar_prefetch = 0 : i64, scratch_operands = 0 : i64, tpu.core_type = #tpu.core_type<tc>, window_params = [{transform_indices = @transform_0, window_bounds = array<i64: 8, 32>}, {transform_indices = @transform_1, window_bounds = array<i64: 32, 128>}, {transform_indices = @transform_2, window_bounds = array<i64: 1, 128>}, {transform_indices = @transform_3, window_bounds = array<i64: 8, 128>}]} {
    %c0_i32 = arith.constant 0 : i32
    %0 = arith.cmpi eq, %arg2, %c0_i32 : i32
    %1 = arith.extui %0 : i1 to i32
    %c0_i32_0 = arith.constant 0 : i32
    %2 = arith.cmpi ne, %1, %c0_i32_0 : i32
    scf.if %2 {
      %cst_10 = arith.constant 0.000000e+00 : f32
      %12 = vector.broadcast %cst_10 : f32 to vector<8x128xf32>
      %c0_11 = arith.constant 0 : index
      %c0_12 = arith.constant 0 : index
      %13 = vector.load %arg6[%c0_11, %c0_12] : memref<8x128xf32, #tpu.memory_space<vmem>>, vector<8x128xf32>
      tpu.vector_store %arg6[%c0_11, %c0_12], %12 {strides = array<i32>} : memref<8x128xf32, #tpu.memory_space<vmem>>, vector<8x128xf32>,
    } else {
    }
    %c0 = arith.constant 0 : index
    %c0_1 = arith.constant 0 : index
    %3 = vector.load %arg6[%c0, %c0_1] : memref<8x128xf32, #tpu.memory_space<vmem>>, vector<8x128xf32>
    %c0_2 = arith.constant 0 : index
    %c0_3 = arith.constant 0 : index
    %4 = vector.load %arg3[%c0_2, %c0_3] : memref<8x32xf32, #tpu.memory_space<vmem>>, vector<8x32xf32>
    %c0_4 = arith.constant 0 : index
    %c0_5 = arith.constant 0 : index
    %5 = vector.load %arg4[%c0_4, %c0_5] : memref<32x128xf32, #tpu.memory_space<vmem>>, vector<32x128xf32>
    %cst = arith.constant dense<0.000000e+00> : vector<8x128xf32>
    %6 = tpu.matmul %4, %5, %cst {dimension_numbers = #tpu.dot_dimension_numbers<[1], [0], [0], [1], [0, 0, 1, 1], [], []>} : vector<8x32xf32>, vector<32x128xf32>, vector<8x128xf32> -> vector<8x128xf32>
    %7 = arith.addf %3, %6 : vector<8x128xf32>
    %c0_6 = arith.constant 0 : index
    %c0_7 = arith.constant 0 : index
    %8 = vector.load %arg6[%c0_6, %c0_7] : memref<8x128xf32, #tpu.memory_space<vmem>>, vector<8x128xf32>
    tpu.vector_store %arg6[%c0_6, %c0_7], %7 {strides = array<i32>} : memref<8x128xf32, #tpu.memory_space<vmem>>, vector<8x128xf32>,
    %c0_i32_8 = arith.constant 0 : i32
    %9 = arith.cmpi eq, %arg2, %c0_i32_8 : i32
    %10 = arith.extui %9 : i1 to i32
    %c0_i32_9 = arith.constant 0 : i32
    %11 = arith.cmpi ne, %10, %c0_i32_9 : i32
    scf.if %11 {
      %c0_10 = arith.constant 0 : index
      %c0_11 = arith.constant 0 : index
      %12 = vector.load %arg6[%c0_10, %c0_11] : memref<8x128xf32, #tpu.memory_space<vmem>>, vector<8x128xf32>
      %c0_12 = arith.constant 0 : index
      %c0_13 = arith.constant 0 : index
      %13 = vector.load %arg5[%c0_12, %c0_13] : memref<1x128xf32, #tpu.memory_space<vmem>>, vector<1x128xf32>
      %14 = vector.broadcast %13 : vector<1x128xf32> to vector<8x128xf32>
      %15 = arith.addf %12, %14 : vector<8x128xf32>
      %c0_14 = arith.constant 0 : index
      %c0_15 = arith.constant 0 : index
      %16 = vector.load %arg6[%c0_14, %c0_15] : memref<8x128xf32, #tpu.memory_space<vmem>>, vector<8x128xf32>
      tpu.vector_store %arg6[%c0_14, %c0_15], %15 {strides = array<i32>} : memref<8x128xf32, #tpu.memory_space<vmem>>, vector<8x128xf32>,
    } else {
    }
    return
  }
  func.func @transform_0(%arg0: i32, %arg1: i32, %arg2: i32) -> (i32, i32) {
    %c0_i32 = arith.constant 0 : i32
    return %arg0, %arg2 : i32, i32
  }
  func.func @transform_1(%arg0: i32, %arg1: i32, %arg2: i32) -> (i32, i32) {
    %c0_i32 = arith.constant 0 : i32
    return %arg2, %arg1 : i32, i32
  }
  func.func @transform_2(%arg0: i32, %arg1: i32, %arg2: i32) -> (i32, i32) {
    %c0_i32 = arith.constant 0 : i32
    %c0_i32_0 = arith.constant 0 : i32
    return %c0_i32, %arg1 : i32, i32
  }
  func.func @transform_3(%arg0: i32, %arg1: i32, %arg2: i32) -> (i32, i32) {
    %c0_i32 = arith.constant 0 : i32
    return %arg0, %arg1 : i32, i32
  }
}

</mosaic_0001>

<llo_original>
// kernel: _linear_projection_2d.1
$region0: #{_linear_projection_2d.1}
  #allocation0 [shape = 'u32[]', space=smem, size = 0x4, offset = 0x4, fixed_abs, tag = 'smem constant byte address 0x4 - core index']
  #allocation1 [shape = 'u32[144,128]{1,0:T(1,128)}', space=vmem, size = 0x12000, scoped, tag = 'internal scratch']
  %s0 = inlined_call_operand.hbm [shape: f32[8,32], index: 0, kind: input, shape index: {}]
  %s1 = inlined_call_operand.hbm [shape: f32[32,128], index: 1, kind: input, shape index: {}]
  %s2 = inlined_call_operand.vmem [shape: f32[1,128], index: 2, kind: input, shape index: {}]
  %s3 = inlined_call_operand.hbm [shape: f32[8,128], index: 3, kind: output, shape index: {}]
  %s4 = sld [smem:[#allocation0]]
  $region38: #{_linear_projection_2d.1} parent=0
    _
  %s6 = ssub.s32 1, %s4
  %s7 = scalar_select 0, %s6, %s4
  $region1: #{_linear_projection_2d.1} parent=0
    #allocation2 [shape = 'u8[4096]{0}', space=vmem, size = 0x1000, scoped, tag = 'input window, operand 0, single buffered']
    #allocation3 [shape = 's32[1]{0}', space=sflag, size = 0x4, scoped, tag = 'scoped memory for _linear_projection_2d.1']
    #allocation4 [shape = 's32[1]{0}', space=sflag, size = 0x4, scoped, tag = 'scoped memory for _linear_projection_2d.1']
    #allocation5 [shape = 'u8[16384]{0}', space=vmem, size = 0x4000, scoped, tag = 'input window, operand 1, single buffered']
    #allocation6 [shape = 's32[1]{0}', space=sflag, size = 0x4, scoped, tag = 'scoped memory for _linear_projection_2d.1']
    #allocation7 [shape = 'u8[4096]{0}', space=vmem, size = 0x1000, scoped, tag = 'output window, operand 0, single buffered']
    %8 = vsyncpa [#allocation3], 0
    %9 = vsyncpa [#allocation6], 0
    %10 = vsyncpa [#allocation4], 0
    // Predicated region
    $region2: #{_linear_projection_2d.1} parent=1 // pred_check
      _
    $region3: #{_linear_projection_2d.1} parent=1 // pred_check_branch
      %12 = sbr.rel (0) target = $region5
    $region4: #{_linear_projection_2d.1} parent=1 // pred_region
      %s14 = ssub.s32 128, 128
      %15 = vsyncadd [#allocation3], %s14
      %s17 = sshll.u32 [#allocation2], 4
      %s18 = int_to_ptr.vmem [resolvable:$true] %s17
      %20 = dma.hbm_to_vmem [thread:$0]  %s0, 128, %s18, [#allocation3]
    $region5: #{_linear_projection_2d.1} parent=1 // pred_fallthru
      _
    // Predicated region
    $region6: #{_linear_projection_2d.1} parent=1 // pred_check
      _
    $region7: #{_linear_projection_2d.1} parent=1 // pred_check_branch
      %22 = sbr.rel (0) target = $region9
    $region8: #{_linear_projection_2d.1} parent=1 // pred_region
      %s24 = ssub.s32 512, 512
      %25 = vsyncadd [#allocation6], %s24
      %s26 = sshll.u32 [#allocation5], 4
      %s27 = int_to_ptr.vmem [resolvable:$true] %s26
      %32 = dma.hbm_to_vmem [thread:$0]  %s1, 512, %s27, [#allocation6], 128, 128, 8
    $region9: #{_linear_projection_2d.1} parent=1 // pred_fallthru
      _
    // Predicated region
    $region10: #{_linear_projection_2d.1} parent=1 // pred_check
      _
    $region11: #{_linear_projection_2d.1} parent=1 // pred_check_branch
      %34 = sbr.rel (0) target = $region13
    $region12: #{_linear_projection_2d.1} parent=1 // pred_region
      _
    $region13: #{_linear_projection_2d.1} parent=1 // pred_fallthru
      _
    // Predicated region
    $region14: #{_linear_projection_2d.1} parent=1 // pred_check
      _
    $region15: #{_linear_projection_2d.1} parent=1 // pred_check_branch
      %36 = sbr.rel (0) target = $region17
    $region16: #{_linear_projection_2d.1} parent=1 // pred_region
      %37 = dma.done [#allocation3], 128
    $region17: #{_linear_projection_2d.1} parent=1 // pred_fallthru
      _
    // Predicated region
    $region18: #{_linear_projection_2d.1} parent=1 // pred_check
      _
    $region19: #{_linear_projection_2d.1} parent=1 // pred_check_branch
      %39 = sbr.rel (0) target = $region21
    $region20: #{_linear_projection_2d.1} parent=1 // pred_region
      %40 = dma.done [#allocation6], 512
    $region21: #{_linear_projection_2d.1} parent=1 // pred_fallthru
      _
    %p41 = scmp.eq.s32.totalorder 0, 0
    // Predicated region
    $region22: #{_linear_projection_2d.1} parent=1 // pred_check
      %p42 = pneg %p41
    $region23: #{_linear_projection_2d.1} parent=1 // pred_check_branch
      %44 = sbr.rel (%p42) target = $region25
    $region24: #{_linear_projection_2d.1} parent=1 // pred_region
      %45 = vst [vmem:[#allocation7] sm:$0xff] 0.0
    $region25: #{_linear_projection_2d.1} parent=1 // pred_fallthru
      _
    %v46 = vld [vmem:[#allocation7] sm:$0xff]
    %v47 = vld [vmem:[#allocation2] sm:$0xff]
    %v48 = vld [vmem:[#allocation5] sm:$0xff]
    %v49 = vld [vmem:[#allocation5 + $0x8] sm:$0xff]
    %v50 = vld [vmem:[#allocation5 + $0x10] sm:$0xff]
    %v51 = vld [vmem:[#allocation5 + $0x18] sm:$0xff]
    %vm52 = vcmask 261120
    %v54 = vsel %vm52, %v47, 0
    %56 = vmatprep.subr.mxu0 0.0
    %57 = vmatpush1.msra.mxu0 %v48
    %58 = vmatprep.subr.mxu0 0.0
    %59 = vmatpush1.msra.mxu0 %v49
    %60 = vmatprep.subr.mxu0 0.0
    %61 = vmatpush1.msra.mxu0 %v50
    %62 = vmatprep.subr.mxu0 0.0
    %63 = vmatpush1.msra.mxu0 %v51
    %64 = vmatprep.subr.mxu0 0.0
    %65 = vmatpush1.msra.mxu0 0.0
    %66 = vmatprep.subr.mxu0 0.0
    %67 = vmatpush1.msra.mxu0 0.0
    %68 = vmatprep.subr.mxu0 0.0
    %69 = vmatpush1.msra.mxu0 0.0
    %70 = vmatprep.subr.mxu0 0.0
    %71 = vmatpush1.msra.mxu0 0.0
    %72 = vmatprep.subr.mxu0 0.0
    %73 = vmatpush1.msra.mxu0 0.0
    %74 = vmatprep.subr.mxu0 0.0
    %75 = vmatpush1.msra.mxu0 0.0
    %76 = vmatprep.subr.mxu0 0.0
    %77 = vmatpush1.msra.mxu0 0.0
    %78 = vmatprep.subr.mxu0 0.0
    %79 = vmatpush1.msra.mxu0 0.0
    %80 = vmatprep.subr.mxu0 0.0
    %81 = vmatpush1.msra.mxu0 0.0
    %82 = vmatprep.subr.mxu0 0.0
    %83 = vmatpush1.msra.mxu0 0.0
    %84 = vmatprep.subr.mxu0 0.0
    %85 = vmatpush1.msra.mxu0 0.0
    %86 = vmatprep.subr.mxu0 0.0
    %87 = vmatpush1.msra.mxu0 0.0
    %88 = vmatprep.subr.mxu0 0.0
    %89 = vmatpush1.msra.mxu0 0.0
    %90 = vmatprep.subr.mxu0 0.0
    %91 = vmatpush1.msra.mxu0 0.0
    %92 = vmatprep.subr.mxu0 0.0
    %93 = vmatpush1.msra.mxu0 0.0
    %94 = vmatprep.subr.mxu0 0.0
    %95 = vmatpush1.msra.mxu0 0.0
    %96 = vmatprep.subr.mxu0 0.0
    %97 = vmatpush1.msra.mxu0 0.0
    %98 = vmatprep.subr.mxu0 0.0
    %99 = vmatpush1.msra.mxu0 0.0
    %100 = vmatprep.subr.mxu0 0.0
    %101 = vmatpush1.msra.mxu0 0.0
    %102 = vmatprep.subr.mxu0 0.0
    %103 = vmatpush1.msra.mxu0 0.0
    %104 = vmatprep.subr.mxu0 0.0
    %105 = vmatpush1.msra.mxu0 0.0
    %106 = vmatprep.subr.mxu0 0.0
    %107 = vmatpush1.msra.mxu0 0.0
    %108 = vmatprep.subr.mxu0 0.0
    %109 = vmatpush1.msra.mxu0 0.0
    %110 = vmatprep.subr.mxu0 0.0
    %111 = vmatpush1.msra.mxu0 0.0
    %112 = vmatprep.subr.mxu0 0.0
    %113 = vmatpush1.msra.mxu0 0.0
    %114 = vmatprep.subr.mxu0 0.0
    %115 = vmatpush1.msra.mxu0 0.0
    %116 = vmatprep.subr.mxu0 0.0
    %117 = vmatpush1.msra.mxu0 0.0
    %118 = vmatprep.subr.mxu0 0.0
    %119 = vmatpush1.msra.mxu0 0.0
    %120 = vmatprep.mubr.f32.mxu0 0.0
    %121 = vmatmul.mubr.f32.gmra.mrb[0].mxu0 %v54
    %v122 = vpop.f32.mrb[0].mxu0
    %v123 = vadd.f32 0.0, %v122
    %v124 = vpop.f32.mrb[0].mxu0
    %125 = vdwg.mxu0
    %v126 = vadd.f32 %v46, %v123
    %127 = vst [vmem:[#allocation7] sm:$0xff] %v126
    // Predicated region
    $region26: #{_linear_projection_2d.1} parent=1 // pred_check
      %p128 = pneg %p41
    $region27: #{_linear_projection_2d.1} parent=1 // pred_check_branch
      %130 = sbr.rel (%p128) target = $region29
    $region28: #{_linear_projection_2d.1} parent=1 // pred_region
      %v131 = vld [vmem:[#allocation7] sm:$0xff]
      %v132 = vld [vmem:[%s2] sm:$0x1]
      %v134 = vlaneseq
      %v135 = vshrl.u32 %v134, 7
      %v136 = vsub.s32 0, %v135
      %v137 = vrot.slane %v132, %v136
      %v139 = vadd.f32 %v131, %v137
      %140 = vst [vmem:[#allocation7] sm:$0xff] %v139
    $region29: #{_linear_projection_2d.1} parent=1 // pred_fallthru
      _
    // Predicated region
    $region30: #{_linear_projection_2d.1} parent=1 // pred_check
      _
    $region31: #{_linear_projection_2d.1} parent=1 // pred_check_branch
      %142 = sbr.rel (0) target = $region33
    $region32: #{_linear_projection_2d.1} parent=1 // pred_region
      %s144 = ssub.s32 128, 128
      %145 = vsyncadd [#allocation4], %s144
      %s147 = sshll.u32 [#allocation7], 4
      %s148 = int_to_ptr.vmem [resolvable:$true] %s147
      %150 = dma.vmem_to_hbm [thread:$0]  %s148, 128, %s3, [#allocation4]
    $region33: #{_linear_projection_2d.1} parent=1 // pred_fallthru
      _
    // Predicated region
    $region34: #{_linear_projection_2d.1} parent=1 // pred_check
      _
    $region35: #{_linear_projection_2d.1} parent=1 // pred_check_branch
      %152 = sbr.rel (0) target = $region37
    $region36: #{_linear_projection_2d.1} parent=1 // pred_region
      %153 = dma.done [#allocation4], 128
    $region37: #{_linear_projection_2d.1} parent=1 // pred_fallthru
      _
    %154 = vsyncpa [#allocation3], 1
    %155 = vsyncpa [#allocation6], 1
    %156 = vsyncpa [#allocation4], 1

</llo_original>
